<compile_context>
chip_gen: v7x
topology: tpu7x:2x2x1
jax: 0.10.0
libtpu: 0.0.40
codegen_flags: <defaults>
</compile_context>

<pallas_src>
import functools

import jax
import jax.numpy as jnp
from jax.experimental import pallas as pl
from jax.experimental.pallas import tpu as pltpu


def _round_up(x, m):
    return ((x + m - 1) // m) * m


def _classifier_kernel(dim_in, dim_h, num_hidden, dim_out,
                       p_ref, x_ref, o_ref):
    """p_ref: (P,) f32 in SMEM (packed params, single DMA).
       x_ref: (dim_in, R, 128) f32 -- batch packed onto full (8,128) vregs.
       o_ref: (dim_out, R, 128) f32 -- full-vreg, lane-dense stores."""
    # --- static offsets into the packed parameter vector (must match _pack_params) ---
    off = 0
    w_in_off = off; off += dim_in * dim_h          # w_in stored (in, out) row-major
    b_in_off = off; off += dim_h
    c_off = off; a_off = off + 1; lamb_off = off + 2; off += 3
    hidden_offs = []
    for _ in range(num_hidden):
        w_off = off; off += dim_h * dim_h
        b_off = off; off += dim_h
        hidden_offs.append((w_off, b_off))
    w_out_off = off; off += dim_h * dim_out
    b_out_off = off; off += dim_out

    # Per-feature slabs, each (R, 128): fully sublane/lane dense.
    xs = [x_ref[k] for k in range(dim_in)]

    # fc_in: h[j] = sum_k x[k] * w_in[k, j] + b_in[j]  (unrolled full-vreg VPU FMAs)
    h = []
    for j in range(dim_h):
        acc = xs[0] * p_ref[w_in_off + 0 * dim_h + j]
        for k in range(1, dim_in):
            acc = acc + xs[k] * p_ref[w_in_off + k * dim_h + j]
        h.append(acc + p_ref[b_in_off + j])

    # split_tanh: v + c * tanh(lamb * (v - a))  (scalars from SMEM, tanh on EUP)
    c = p_ref[c_off]
    a = p_ref[a_off]
    lamb = p_ref[lamb_off]
    h = [v + c * jnp.tanh(lamb * (v - a)) for v in h]

    # hidden layers, each followed by ReLU
    for (w_off, b_off) in hidden_offs:
        new_h = []
        for j in range(dim_h):
            acc = h[0] * p_ref[w_off + 0 * dim_h + j]
            for k in range(1, dim_h):
                acc = acc + h[k] * p_ref[w_off + k * dim_h + j]
            new_h.append(jnp.maximum(acc + p_ref[b_off + j], 0.0))
        h = new_h

    # fc_out: full (R, 128) unmasked stores
    for j in range(dim_out):
        acc = h[0] * p_ref[w_out_off + 0 * dim_out + j]
        for k in range(1, dim_h):
            acc = acc + h[k] * p_ref[w_out_off + k * dim_out + j]
        o_ref[j] = (acc + p_ref[b_out_off + j]).astype(o_ref.dtype)


def _pack_params(params):
    """Pack every parameter into one flat f32 vector (order matches kernel offsets)."""
    parts = [params["w_in"].reshape(-1), params["b_in"].reshape(-1),
             params["c"].reshape(-1), params["a"].reshape(-1), params["lamb"].reshape(-1)]
    for w, b in params["hiddens"]:
        parts.append(w.reshape(-1))
        parts.append(b.reshape(-1))
    parts.append(params["w_out"].reshape(-1))
    parts.append(params["b_out"].reshape(-1))
    return jnp.concatenate(parts).astype(jnp.float32)


def classifier1l_forward(x, params, block_rows=64):
    """x: (batch, dim_in) f32.  Returns (batch, 2) f32.

    block_rows = rows of 128 lanes per grid step (multiple of 8). 64 -> 8192
    samples/step; use ~32 on v5e to keep intermediates register-resident,
    64-128 on v6e/v7x."""
    dim_in, dim_h = params["w_in"].shape
    num_hidden = len(params["hiddens"])
    dim_out = params["w_out"].shape[1]
    batch = x.shape[0]

    packed = _pack_params(params)

    # Lane/sublane-dense layout: batch -> (rows, 128); pad batch only to a lane
    # multiple (plus minimal sublane rounding), not to a full tile.
    rows = -(-batch // 128)                      # ceil(batch / 128)
    if rows >= 16:
        # >=2 grid steps so both v7x TensorCores get work ("parallel" axis),
        # while each step still amortizes the ~0.35us per-step overhead.
        g = max(2, -(-rows // block_rows))
    else:
        g = 1
    r_blk = _round_up(-(-rows // g), 8)          # rows per grid step, multiple of 8
    rows_pad = g * r_blk
    b_pad = rows_pad * 128

    xt = jnp.transpose(x).astype(jnp.float32)    # (dim_in, batch) feature-major
    if b_pad != batch:
        xt = jnp.pad(xt, ((0, 0), (0, b_pad - batch)))
    x3 = xt.reshape(dim_in, rows_pad, 128)       # free reshape (contiguous)

    kernel = functools.partial(_classifier_kernel, dim_in, dim_h, num_hidden, dim_out)

    out3 = pl.pallas_call(
        kernel,
        out_shape=jax.ShapeDtypeStruct((dim_out, rows_pad, 128), jnp.float32),
        grid=(g,),
        in_specs=[
            # one tiny packed-parameter vector, resident in SMEM (single DMA)
            pl.BlockSpec(memory_space=pltpu.MemorySpace.SMEM),
            # activations: (dim_in, r_blk, 128) blocks -> full (8,128) vreg packing
            pl.BlockSpec((dim_in, r_blk, 128), lambda i: (0, i, 0)),
        ],
        out_specs=pl.BlockSpec((dim_out, r_blk, 128), lambda i: (0, i, 0)),
        compiler_params=pltpu.CompilerParams(
            dimension_semantics=("parallel",),   # batch axis split across TCs on v7x
        ),
    )(packed, x3)

    out = out3.reshape(dim_out, b_pad)[:, :batch]
    return jnp.transpose(out)


def init_params(key, dim_in=2, num_hidden=2, dim_hidden=3, out_dim=2, lamb=10.0):
    """Deterministic init matching the PyTorch module's __init__.
    Linear weights: xavier_uniform (activation != 'relu'); biases zero.
    Weights stored transposed as (in, out) so forward is x @ W + b."""
    def xavier_uniform(k, fan_in, fan_out):
        bound = jnp.sqrt(6.0 / (fan_in + fan_out))
        return jax.random.uniform(k, (fan_in, fan_out), jnp.float32, -bound, bound)

    keys = jax.random.split(key, 5 + num_hidden)
    params = {
        "w_in": xavier_uniform(keys[0], dim_in, dim_hidden),
        "b_in": jnp.zeros((dim_hidden,), jnp.float32),
        # split_tanh params: c ~ U[0,1), a ~ N(0,1), lamb = 10.0
        "c": jax.random.uniform(keys[1], (1,), jnp.float32),
        "a": jax.random.normal(keys[2], (1,), jnp.float32),
        "lamb": jnp.full((1,), lamb, jnp.float32),
        "hiddens": [],
        "w_out": xavier_uniform(keys[3], dim_hidden, out_dim),
        "b_out": jnp.zeros((out_dim,), jnp.float32),
    }
    for i in range(num_hidden):
        params["hiddens"].append(
            (xavier_uniform(keys[4 + i], dim_hidden, dim_hidden),
             jnp.zeros((dim_hidden,), jnp.float32)))
    return params


def reference_forward(x, params):
    """Plain-JAX reference for sanity checking."""
    h = x @ params["w_in"] + params["b_in"]
    c, a, lamb = params["c"][0], params["a"][0], params["lamb"][0]
    h = h + c * jnp.tanh(lamb * (h - a))
    for w, b in params["hiddens"]:
        h = jnp.maximum(h @ w + b, 0.0)
    return h @ params["w_out"] + params["b_out"]


if __name__ == "__main__":
    key = jax.random.PRNGKey(0)
    k_p, k_x, k_x2 = jax.random.split(key, 3)

    # Module defaults: dim_of_in=2, num_of_hidden=2, dim_of_hidden=3, out=2.
    batch, dim_in, num_hidden, dim_hidden = 8, 2, 2, 3
    params = init_params(k_p, dim_in, num_hidden, dim_hidden)

    # Small batch (single grid step, minimal sublane padding)
    x = jax.random.normal(k_x, (batch, dim_in), jnp.float32)
    out = classifier1l_forward(x, params)
    jax.block_until_ready(out)
    ref = reference_forward(x, params)
    assert out.shape == (batch, 2)
    assert jnp.allclose(out, ref, atol=1e-5, rtol=1e-4)

    # Larger batch: exercises pad-to-128, sublane rounding and a 2-step parallel grid
    x2 = jax.random.normal(k_x2, (3000, dim_in), jnp.float32)
    out2 = classifier1l_forward(x2, params)
    jax.block_until_ready(out2)
    ref2 = reference_forward(x2, params)
    assert out2.shape == (3000, 2)
    assert jnp.allclose(out2, ref2, atol=1e-5, rtol=1e-4)

    print("KERNEL_OK")
</pallas_src>

<mosaic_0001>
module attributes {stable_mosaic.version = 11 : i64} {
  func.func @_classifier_kernel(%arg0: i32, %arg1: memref<44xf32, #tpu.memory_space<smem>>, %arg2: memref<2x8x128xf32, #tpu.memory_space<vmem>>, %arg3: memref<2x8x128xf32, #tpu.memory_space<vmem>>) attributes {dimension_semantics = [#tpu.dimension_semantics<parallel>], iteration_bounds = array<i64: 1>, scalar_prefetch = 0 : i64, scratch_operands = 0 : i64, tpu.core_type = #tpu.core_type<tc>, window_params = [{transform_indices = @transform_0, window_bounds = array<i64: 44>}, {transform_indices = @transform_1, window_bounds = array<i64: 2, 8, 128>}, {transform_indices = @transform_2, window_bounds = array<i64: 2, 8, 128>}]} {
    %c0 = arith.constant 0 : index
    %c0_0 = arith.constant 0 : index
    %c0_1 = arith.constant 0 : index
    %0 = vector.load %arg2[%c0, %c0_0, %c0_1] : memref<2x8x128xf32, #tpu.memory_space<vmem>>, vector<1x8x128xf32>
    %1 = vector.shape_cast %0 : vector<1x8x128xf32> to vector<8x128xf32>
    %c1 = arith.constant 1 : index
    %c0_2 = arith.constant 0 : index
    %c0_3 = arith.constant 0 : index
    %2 = vector.load %arg2[%c1, %c0_2, %c0_3] : memref<2x8x128xf32, #tpu.memory_space<vmem>>, vector<1x8x128xf32>
    %3 = vector.shape_cast %2 : vector<1x8x128xf32> to vector<8x128xf32>
    %c0_4 = arith.constant 0 : index
    %4 = memref.load %arg1[%c0_4] : memref<44xf32, #tpu.memory_space<smem>>
    %5 = vector.broadcast %4 : f32 to vector<8x128xf32>
    %6 = arith.mulf %1, %5 : vector<8x128xf32>
    %c3 = arith.constant 3 : index
    %7 = memref.load %arg1[%c3] : memref<44xf32, #tpu.memory_space<smem>>
    %8 = vector.broadcast %7 : f32 to vector<8x128xf32>
    %9 = arith.mulf %3, %8 : vector<8x128xf32>
    %10 = arith.addf %6, %9 : vector<8x128xf32>
    %c6 = arith.constant 6 : index
    %11 = memref.load %arg1[%c6] : memref<44xf32, #tpu.memory_space<smem>>
    %12 = vector.broadcast %11 : f32 to vector<8x128xf32>
    %13 = arith.addf %10, %12 : vector<8x128xf32>
    %c1_5 = arith.constant 1 : index
    %14 = memref.load %arg1[%c1_5] : memref<44xf32, #tpu.memory_space<smem>>
    %15 = vector.broadcast %14 : f32 to vector<8x128xf32>
    %16 = arith.mulf %1, %15 : vector<8x128xf32>
    %c4 = arith.constant 4 : index
    %17 = memref.load %arg1[%c4] : memref<44xf32, #tpu.memory_space<smem>>
    %18 = vector.broadcast %17 : f32 to vector<8x128xf32>
    %19 = arith.mulf %3, %18 : vector<8x128xf32>
    %20 = arith.addf %16, %19 : vector<8x128xf32>
    %c7 = arith.constant 7 : index
    %21 = memref.load %arg1[%c7] : memref<44xf32, #tpu.memory_space<smem>>
    %22 = vector.broadcast %21 : f32 to vector<8x128xf32>
    %23 = arith.addf %20, %22 : vector<8x128xf32>
    %c2 = arith.constant 2 : index
    %24 = memref.load %arg1[%c2] : memref<44xf32, #tpu.memory_space<smem>>
    %25 = vector.broadcast %24 : f32 to vector<8x128xf32>
    %26 = arith.mulf %1, %25 : vector<8x128xf32>
    %c5 = arith.constant 5 : index
    %27 = memref.load %arg1[%c5] : memref<44xf32, #tpu.memory_space<smem>>
    %28 = vector.broadcast %27 : f32 to vector<8x128xf32>
    %29 = arith.mulf %3, %28 : vector<8x128xf32>
    %30 = arith.addf %26, %29 : vector<8x128xf32>
    %c8 = arith.constant 8 : index
    %31 = memref.load %arg1[%c8] : memref<44xf32, #tpu.memory_space<smem>>
    %32 = vector.broadcast %31 : f32 to vector<8x128xf32>
    %33 = arith.addf %30, %32 : vector<8x128xf32>
    %c9 = arith.constant 9 : index
    %34 = memref.load %arg1[%c9] : memref<44xf32, #tpu.memory_space<smem>>
    %c10 = arith.constant 10 : index
    %35 = memref.load %arg1[%c10] : memref<44xf32, #tpu.memory_space<smem>>
    %c11 = arith.constant 11 : index
    %36 = memref.load %arg1[%c11] : memref<44xf32, #tpu.memory_space<smem>>
    %37 = vector.broadcast %35 : f32 to vector<8x128xf32>
    %38 = arith.subf %13, %37 : vector<8x128xf32>
    %39 = vector.broadcast %36 : f32 to vector<8x128xf32>
    %40 = arith.mulf %39, %38 : vector<8x128xf32>
    %41 = math.tanh %40 : vector<8x128xf32>
    %42 = vector.broadcast %34 : f32 to vector<8x128xf32>
    %43 = arith.mulf %42, %41 : vector<8x128xf32>
    %44 = arith.addf %13, %43 : vector<8x128xf32>
    %45 = vector.broadcast %35 : f32 to vector<8x128xf32>
    %46 = arith.subf %23, %45 : vector<8x128xf32>
    %47 = vector.broadcast %36 : f32 to vector<8x128xf32>
    %48 = arith.mulf %47, %46 : vector<8x128xf32>
    %49 = math.tanh %48 : vector<8x128xf32>
    %50 = vector.broadcast %34 : f32 to vector<8x128xf32>
    %51 = arith.mulf %50, %49 : vector<8x128xf32>
    %52 = arith.addf %23, %51 : vector<8x128xf32>
    %53 = vector.broadcast %35 : f32 to vector<8x128xf32>
    %54 = arith.subf %33, %53 : vector<8x128xf32>
    %55 = vector.broadcast %36 : f32 to vector<8x128xf32>
    %56 = arith.mulf %55, %54 : vector<8x128xf32>
    %57 = math.tanh %56 : vector<8x128xf32>
    %58 = vector.broadcast %34 : f32 to vector<8x128xf32>
    %59 = arith.mulf %58, %57 : vector<8x128xf32>
    %60 = arith.addf %33, %59 : vector<8x128xf32>
    %c12 = arith.constant 12 : index
    %61 = memref.load %arg1[%c12] : memref<44xf32, #tpu.memory_space<smem>>
    %62 = vector.broadcast %61 : f32 to vector<8x128xf32>
    %63 = arith.mulf %44, %62 : vector<8x128xf32>
    %c15 = arith.constant 15 : index
    %64 = memref.load %arg1[%c15] : memref<44xf32, #tpu.memory_space<smem>>
    %65 = vector.broadcast %64 : f32 to vector<8x128xf32>
    %66 = arith.mulf %52, %65 : vector<8x128xf32>
    %67 = arith.addf %63, %66 : vector<8x128xf32>
    %c18 = arith.constant 18 : index
    %68 = memref.load %arg1[%c18] : memref<44xf32, #tpu.memory_space<smem>>
    %69 = vector.broadcast %68 : f32 to vector<8x128xf32>
    %70 = arith.mulf %60, %69 : vector<8x128xf32>
    %71 = arith.addf %67, %70 : vector<8x128xf32>
    %c21 = arith.constant 21 : index
    %72 = memref.load %arg1[%c21] : memref<44xf32, #tpu.memory_space<smem>>
    %73 = vector.broadcast %72 : f32 to vector<8x128xf32>
    %74 = arith.addf %71, %73 : vector<8x128xf32>
    %cst = arith.constant 0.000000e+00 : f32
    %75 = vector.broadcast %cst : f32 to vector<8x128xf32>
    %76 = arith.maximumf %74, %75 : vector<8x128xf32>
    %c13 = arith.constant 13 : index
    %77 = memref.load %arg1[%c13] : memref<44xf32, #tpu.memory_space<smem>>
    %78 = vector.broadcast %77 : f32 to vector<8x128xf32>
    %79 = arith.mulf %44, %78 : vector<8x128xf32>
    %c16 = arith.constant 16 : index
    %80 = memref.load %arg1[%c16] : memref<44xf32, #tpu.memory_space<smem>>
    %81 = vector.broadcast %80 : f32 to vector<8x128xf32>
    %82 = arith.mulf %52, %81 : vector<8x128xf32>
    %83 = arith.addf %79, %82 : vector<8x128xf32>
    %c19 = arith.constant 19 : index
    %84 = memref.load %arg1[%c19] : memref<44xf32, #tpu.memory_space<smem>>
    %85 = vector.broadcast %84 : f32 to vector<8x128xf32>
    %86 = arith.mulf %60, %85 : vector<8x128xf32>
    %87 = arith.addf %83, %86 : vector<8x128xf32>
    %c22 = arith.constant 22 : index
    %88 = memref.load %arg1[%c22] : memref<44xf32, #tpu.memory_space<smem>>
    %89 = vector.broadcast %88 : f32 to vector<8x128xf32>
    %90 = arith.addf %87, %89 : vector<8x128xf32>
    %cst_6 = arith.constant 0.000000e+00 : f32
    %91 = vector.broadcast %cst_6 : f32 to vector<8x128xf32>
    %92 = arith.maximumf %90, %91 : vector<8x128xf32>
    %c14 = arith.constant 14 : index
    %93 = memref.load %arg1[%c14] : memref<44xf32, #tpu.memory_space<smem>>
    %94 = vector.broadcast %93 : f32 to vector<8x128xf32>
    %95 = arith.mulf %44, %94 : vector<8x128xf32>
    %c17 = arith.constant 17 : index
    %96 = memref.load %arg1[%c17] : memref<44xf32, #tpu.memory_space<smem>>
    %97 = vector.broadcast %96 : f32 to vector<8x128xf32>
    %98 = arith.mulf %52, %97 : vector<8x128xf32>
    %99 = arith.addf %95, %98 : vector<8x128xf32>
    %c20 = arith.constant 20 : index
    %100 = memref.load %arg1[%c20] : memref<44xf32, #tpu.memory_space<smem>>
    %101 = vector.broadcast %100 : f32 to vector<8x128xf32>
    %102 = arith.mulf %60, %101 : vector<8x128xf32>
    %103 = arith.addf %99, %102 : vector<8x128xf32>
    %c23 = arith.constant 23 : index
    %104 = memref.load %arg1[%c23] : memref<44xf32, #tpu.memory_space<smem>>
    %105 = vector.broadcast %104 : f32 to vector<8x128xf32>
    %106 = arith.addf %103, %105 : vector<8x128xf32>
    %cst_7 = arith.constant 0.000000e+00 : f32
    %107 = vector.broadcast %cst_7 : f32 to vector<8x128xf32>
    %108 = arith.maximumf %106, %107 : vector<8x128xf32>
    %c24 = arith.constant 24 : index
    %109 = memref.load %arg1[%c24] : memref<44xf32, #tpu.memory_space<smem>>
    %110 = vector.broadcast %109 : f32 to vector<8x128xf32>
    %111 = arith.mulf %76, %110 : vector<8x128xf32>
    %c27 = arith.constant 27 : index
    %112 = memref.load %arg1[%c27] : memref<44xf32, #tpu.memory_space<smem>>
    %113 = vector.broadcast %112 : f32 to vector<8x128xf32>
    %114 = arith.mulf %92, %113 : vector<8x128xf32>
    %115 = arith.addf %111, %114 : vector<8x128xf32>
    %c30 = arith.constant 30 : index
    %116 = memref.load %arg1[%c30] : memref<44xf32, #tpu.memory_space<smem>>
    %117 = vector.broadcast %116 : f32 to vector<8x128xf32>
    %118 = arith.mulf %108, %117 : vector<8x128xf32>
    %119 = arith.addf %115, %118 : vector<8x128xf32>
    %c33 = arith.constant 33 : index
    %120 = memref.load %arg1[%c33] : memref<44xf32, #tpu.memory_space<smem>>
    %121 = vector.broadcast %120 : f32 to vector<8x128xf32>
    %122 = arith.addf %119, %121 : vector<8x128xf32>
    %cst_8 = arith.constant 0.000000e+00 : f32
    %123 = vector.broadcast %cst_8 : f32 to vector<8x128xf32>
    %124 = arith.maximumf %122, %123 : vector<8x128xf32>
    %c25 = arith.constant 25 : index
    %125 = memref.load %arg1[%c25] : memref<44xf32, #tpu.memory_space<smem>>
    %126 = vector.broadcast %125 : f32 to vector<8x128xf32>
    %127 = arith.mulf %76, %126 : vector<8x128xf32>
    %c28 = arith.constant 28 : index
    %128 = memref.load %arg1[%c28] : memref<44xf32, #tpu.memory_space<smem>>
    %129 = vector.broadcast %128 : f32 to vector<8x128xf32>
    %130 = arith.mulf %92, %129 : vector<8x128xf32>
    %131 = arith.addf %127, %130 : vector<8x128xf32>
    %c31 = arith.constant 31 : index
    %132 = memref.load %arg1[%c31] : memref<44xf32, #tpu.memory_space<smem>>
    %133 = vector.broadcast %132 : f32 to vector<8x128xf32>
    %134 = arith.mulf %108, %133 : vector<8x128xf32>
    %135 = arith.addf %131, %134 : vector<8x128xf32>
    %c34 = arith.constant 34 : index
    %136 = memref.load %arg1[%c34] : memref<44xf32, #tpu.memory_space<smem>>
    %137 = vector.broadcast %136 : f32 to vector<8x128xf32>
    %138 = arith.addf %135, %137 : vector<8x128xf32>
    %cst_9 = arith.constant 0.000000e+00 : f32
    %139 = vector.broadcast %cst_9 : f32 to vector<8x128xf32>
    %140 = arith.maximumf %138, %139 : vector<8x128xf32>
    %c26 = arith.constant 26 : index
    %141 = memref.load %arg1[%c26] : memref<44xf32, #tpu.memory_space<smem>>
    %142 = vector.broadcast %141 : f32 to vector<8x128xf32>
    %143 = arith.mulf %76, %142 : vector<8x128xf32>
    %c29 = arith.constant 29 : index
    %144 = memref.load %arg1[%c29] : memref<44xf32, #tpu.memory_space<smem>>
    %145 = vector.broadcast %144 : f32 to vector<8x128xf32>
    %146 = arith.mulf %92, %145 : vector<8x128xf32>
    %147 = arith.addf %143, %146 : vector<8x128xf32>
    %c32 = arith.constant 32 : index
    %148 = memref.load %arg1[%c32] : memref<44xf32, #tpu.memory_space<smem>>
    %149 = vector.broadcast %148 : f32 to vector<8x128xf32>
    %150 = arith.mulf %108, %149 : vector<8x128xf32>
    %151 = arith.addf %147, %150 : vector<8x128xf32>
    %c35 = arith.constant 35 : index
    %152 = memref.load %arg1[%c35] : memref<44xf32, #tpu.memory_space<smem>>
    %153 = vector.broadcast %152 : f32 to vector<8x128xf32>
    %154 = arith.addf %151, %153 : vector<8x128xf32>
    %cst_10 = arith.constant 0.000000e+00 : f32
    %155 = vector.broadcast %cst_10 : f32 to vector<8x128xf32>
    %156 = arith.maximumf %154, %155 : vector<8x128xf32>
    %c36 = arith.constant 36 : index
    %157 = memref.load %arg1[%c36] : memref<44xf32, #tpu.memory_space<smem>>
    %158 = vector.broadcast %157 : f32 to vector<8x128xf32>
    %159 = arith.mulf %124, %158 : vector<8x128xf32>
    %c38 = arith.constant 38 : index
    %160 = memref.load %arg1[%c38] : memref<44xf32, #tpu.memory_space<smem>>
    %161 = vector.broadcast %160 : f32 to vector<8x128xf32>
    %162 = arith.mulf %140, %161 : vector<8x128xf32>
    %163 = arith.addf %159, %162 : vector<8x128xf32>
    %c40 = arith.constant 40 : index
    %164 = memref.load %arg1[%c40] : memref<44xf32, #tpu.memory_space<smem>>
    %165 = vector.broadcast %164 : f32 to vector<8x128xf32>
    %166 = arith.mulf %156, %165 : vector<8x128xf32>
    %167 = arith.addf %163, %166 : vector<8x128xf32>
    %c42 = arith.constant 42 : index
    %168 = memref.load %arg1[%c42] : memref<44xf32, #tpu.memory_space<smem>>
    %169 = vector.broadcast %168 : f32 to vector<8x128xf32>
    %170 = arith.addf %167, %169 : vector<8x128xf32>
    %c0_11 = arith.constant 0 : index
    %c0_12 = arith.constant 0 : index
    %c0_13 = arith.constant 0 : index
    %171 = vector.load %arg3[%c0_11, %c0_12, %c0_13] : memref<2x8x128xf32, #tpu.memory_space<vmem>>, vector<1x8x128xf32>
    %172 = vector.shape_cast %171 : vector<1x8x128xf32> to vector<8x128xf32>
    %173 = vector.shape_cast %170 : vector<8x128xf32> to vector<1x8x128xf32>
    tpu.vector_store %arg3[%c0_11, %c0_12, %c0_13], %173 {strides = array<i32>} : memref<2x8x128xf32, #tpu.memory_space<vmem>>, vector<1x8x128xf32>,
    %c37 = arith.constant 37 : index
    %174 = memref.load %arg1[%c37] : memref<44xf32, #tpu.memory_space<smem>>
    %175 = vector.broadcast %174 : f32 to vector<8x128xf32>
    %176 = arith.mulf %124, %175 : vector<8x128xf32>
    %c39 = arith.constant 39 : index
    %177 = memref.load %arg1[%c39] : memref<44xf32, #tpu.memory_space<smem>>
    %178 = vector.broadcast %177 : f32 to vector<8x128xf32>
    %179 = arith.mulf %140, %178 : vector<8x128xf32>
    %180 = arith.addf %176, %179 : vector<8x128xf32>
    %c41 = arith.constant 41 : index
    %181 = memref.load %arg1[%c41] : memref<44xf32, #tpu.memory_space<smem>>
    %182 = vector.broadcast %181 : f32 to vector<8x128xf32>
    %183 = arith.mulf %156, %182 : vector<8x128xf32>
    %184 = arith.addf %180, %183 : vector<8x128xf32>
    %c43 = arith.constant 43 : index
    %185 = memref.load %arg1[%c43] : memref<44xf32, #tpu.memory_space<smem>>
    %186 = vector.broadcast %185 : f32 to vector<8x128xf32>
    %187 = arith.addf %184, %186 : vector<8x128xf32>
    %c1_14 = arith.constant 1 : index
    %c0_15 = arith.constant 0 : index
    %c0_16 = arith.constant 0 : index
    %188 = vector.load %arg3[%c1_14, %c0_15, %c0_16] : memref<2x8x128xf32, #tpu.memory_space<vmem>>, vector<1x8x128xf32>
    %189 = vector.shape_cast %188 : vector<1x8x128xf32> to vector<8x128xf32>
    %190 = vector.shape_cast %187 : vector<8x128xf32> to vector<1x8x128xf32>
    tpu.vector_store %arg3[%c1_14, %c0_15, %c0_16], %190 {strides = array<i32>} : memref<2x8x128xf32, #tpu.memory_space<vmem>>, vector<1x8x128xf32>,
    return
  }
  func.func @transform_0(%arg0: i32) -> i32 {
    %c0_i32 = arith.constant 0 : i32
    %c0_i32_0 = arith.constant 0 : i32
    return %c0_i32 : i32
  }
  func.func @transform_1(%arg0: i32) -> (i32, i32, i32) {
    %c0_i32 = arith.constant 0 : i32
    %c0_i32_0 = arith.constant 0 : i32
    %c0_i32_1 = arith.constant 0 : i32
    return %c0_i32, %arg0, %c0_i32_0 : i32, i32, i32
  }
  func.func @transform_2(%arg0: i32) -> (i32, i32, i32) {
    %c0_i32 = arith.constant 0 : i32
    %c0_i32_0 = arith.constant 0 : i32
    %c0_i32_1 = arith.constant 0 : i32
    return %c0_i32, %arg0, %c0_i32_0 : i32, i32, i32
  }
}

</mosaic_0001>

<llo_original>
// kernel: tpu_custom_call.1
$region0: #{tpu_custom_call.1}
  #allocation0 [shape = 'u32[]', space=smem, size = 0x4, offset = 0x4, fixed_abs, tag = 'smem constant byte address 0x4 - core index']
  #allocation1 [shape = 'u32[144,128]{1,0:T(1,128)}', space=vmem, size = 0x12000, scoped, tag = 'internal scratch']
  %s0 = inlined_call_operand.hbm [shape: f32[44], index: 0, kind: input, shape index: {}]
  %s1 = inlined_call_operand.hbm [shape: f32[2,8,128], index: 1, kind: input, shape index: {}]
  %s2 = inlined_call_operand.hbm [shape: f32[2,8,128], index: 2, kind: output, shape index: {}]
  %s3 = sld [smem:[#allocation0]]
  $region26: #{tpu_custom_call.1} parent=0
    _
  %s5 = ssub.s32 1, %s3
  %s6 = scalar_select 0, %s5, %s3
  $region1: #{tpu_custom_call.1} parent=0
    #allocation2 [shape = 'u8[512]{0}', space=smem, size = 0x200, scoped, tag = 'input window, operand 0, single buffered']
    #allocation3 [shape = 's32[1]{0}', space=sflag, size = 0x4, scoped, tag = 'scoped memory for tpu_custom_call.1']
    #allocation4 [shape = 's32[1]{0}', space=sflag, size = 0x4, scoped, tag = 'scoped memory for tpu_custom_call.1']
    #allocation5 [shape = 's32[1]{0}', space=sflag, size = 0x4, scoped, tag = 'scoped memory for tpu_custom_call.1']
    #allocation6 [shape = 'u8[8192]{0}', space=vmem, size = 0x2000, scoped, tag = 'input window, operand 1, single buffered']
    #allocation7 [shape = 'u8[8192]{0}', space=vmem, size = 0x2000, scoped, tag = 'output window, operand 0, single buffered']
    %7 = vsyncpa [#allocation5], 0
    %8 = vsyncpa [#allocation3], 0
    %9 = vsyncpa [#allocation4], 0
    // Predicated region
    $region2: #{tpu_custom_call.1} parent=1 // pred_check
      _
    $region3: #{tpu_custom_call.1} parent=1 // pred_check_branch
      %11 = sbr.rel (0) target = $region5
    $region4: #{tpu_custom_call.1} parent=1 // pred_region
      %s13 = ssub.s32 16, 16
      %14 = vsyncadd [#allocation5], %s13
      %17 = dma.hbm_to_smem %s0, 16, [#allocation2], [#allocation5]
    $region5: #{tpu_custom_call.1} parent=1 // pred_fallthru
      _
    // Predicated region
    $region6: #{tpu_custom_call.1} parent=1 // pred_check
      _
    $region7: #{tpu_custom_call.1} parent=1 // pred_check_branch
      %19 = sbr.rel (0) target = $region9
    $region8: #{tpu_custom_call.1} parent=1 // pred_region
      %s21 = ssub.s32 256, 256
      %22 = vsyncadd [#allocation3], %s21
      %s23 = sshll.u32 [#allocation6], 4
      %s24 = int_to_ptr.vmem [resolvable:$true] %s23
      %29 = dma.hbm_to_vmem [thread:$0]  %s1, 256, %s24, [#allocation3], 128, 128, 8
    $region9: #{tpu_custom_call.1} parent=1 // pred_fallthru
      _
    // Predicated region
    $region10: #{tpu_custom_call.1} parent=1 // pred_check
      _
    $region11: #{tpu_custom_call.1} parent=1 // pred_check_branch
      %31 = sbr.rel (0) target = $region13
    $region12: #{tpu_custom_call.1} parent=1 // pred_region
      %32 = dma.done [#allocation5], 16
    $region13: #{tpu_custom_call.1} parent=1 // pred_fallthru
      _
    // Predicated region
    $region14: #{tpu_custom_call.1} parent=1 // pred_check
      _
    $region15: #{tpu_custom_call.1} parent=1 // pred_check_branch
      %34 = sbr.rel (0) target = $region17
    $region16: #{tpu_custom_call.1} parent=1 // pred_region
      %35 = dma.done [#allocation3], 256
    $region17: #{tpu_custom_call.1} parent=1 // pred_fallthru
      _
    %36 = sfence
    %v37 = vld [vmem:[#allocation6] sm:$0xff]
    %s38 = scalar_lea.vmem [#allocation6], 8
    %v39 = vld [vmem:[%s38] sm:$0xff]
    %s40 = sld [smem:[#allocation2]]
    %v41 = vstv %s40
    %v42 = vmul.f32 %v37, %v41
    %s43 = sld [smem:[#allocation2 + $0x3]]
    %v44 = vstv %s43
    %v45 = vmul.f32 %v39, %v44
    %v46 = vadd.f32 %v42, %v45
    %s47 = sld [smem:[#allocation2 + $0x6]]
    %v48 = vstv %s47
    %v49 = vadd.f32 %v46, %v48
    %s50 = sld [smem:[#allocation2 + $0x1]]
    %v51 = vstv %s50
    %v52 = vmul.f32 %v37, %v51
    %s53 = sld [smem:[#allocation2 + $0x4]]
    %v54 = vstv %s53
    %v55 = vmul.f32 %v39, %v54
    %v56 = vadd.f32 %v52, %v55
    %s57 = sld [smem:[#allocation2 + $0x7]]
    %v58 = vstv %s57
    %v59 = vadd.f32 %v56, %v58
    %s60 = sld [smem:[#allocation2 + $0x2]]
    %v61 = vstv %s60
    %v62 = vmul.f32 %v37, %v61
    %s63 = sld [smem:[#allocation2 + $0x5]]
    %v64 = vstv %s63
    %v65 = vmul.f32 %v39, %v64
    %v66 = vadd.f32 %v62, %v65
    %s67 = sld [smem:[#allocation2 + $0x8]]
    %v68 = vstv %s67
    %v69 = vadd.f32 %v66, %v68
    %s70 = sld [smem:[#allocation2 + $0x9]]
    %s71 = sld [smem:[#allocation2 + $0xa]]
    %s72 = sld [smem:[#allocation2 + $0xb]]
    %v73 = vstv %s71
    %v74 = vsub.f32 %v49, %v73
    %v75 = vstv %s72
    %v76 = vmul.f32 %v75, %v74
    %v77 = vtanh.pop %v76
    %v78 = vstv %s70
    %v79 = vmul.f32 %v78, %v77
    %v80 = vadd.f32 %v49, %v79
    %v81 = vsub.f32 %v59, %v73
    %v82 = vmul.f32 %v75, %v81
    %v83 = vtanh.pop %v82
    %v84 = vmul.f32 %v78, %v83
    %v85 = vadd.f32 %v59, %v84
    %v86 = vsub.f32 %v69, %v73
    %v87 = vmul.f32 %v75, %v86
    %v88 = vtanh.pop %v87
    %v89 = vmul.f32 %v78, %v88
    %v90 = vadd.f32 %v69, %v89
    %s91 = sld [smem:[#allocation2 + $0xc]]
    %v92 = vstv %s91
    %v93 = vmul.f32 %v80, %v92
    %s94 = sld [smem:[#allocation2 + $0xf]]
    %v95 = vstv %s94
    %v96 = vmul.f32 %v85, %v95
    %v97 = vadd.f32 %v93, %v96
    %s98 = sld [smem:[#allocation2 + $0x12]]
    %v99 = vstv %s98
    %v100 = vmul.f32 %v90, %v99
    %v101 = vadd.f32 %v97, %v100
    %s102 = sld [smem:[#allocation2 + $0x15]]
    %v103 = vstv %s102
    %v104 = vadd.f32 %v101, %v103
    %v105 = vmax.f32 %v104, 0.0
    %s106 = sld [smem:[#allocation2 + $0xd]]
    %v107 = vstv %s106
    %v108 = vmul.f32 %v80, %v107
    %s109 = sld [smem:[#allocation2 + $0x10]]
    %v110 = vstv %s109
    %v111 = vmul.f32 %v85, %v110
    %v112 = vadd.f32 %v108, %v111
    %s113 = sld [smem:[#allocation2 + $0x13]]
    %v114 = vstv %s113
    %v115 = vmul.f32 %v90, %v114
    %v116 = vadd.f32 %v112, %v115
    %s117 = sld [smem:[#allocation2 + $0x16]]
    %v118 = vstv %s117
    %v119 = vadd.f32 %v116, %v118
    %v120 = vmax.f32 %v119, 0.0
    %s121 = sld [smem:[#allocation2 + $0xe]]
    %v122 = vstv %s121
    %v123 = vmul.f32 %v80, %v122
    %s124 = sld [smem:[#allocation2 + $0x11]]
    %v125 = vstv %s124
    %v126 = vmul.f32 %v85, %v125
    %v127 = vadd.f32 %v123, %v126
    %s128 = sld [smem:[#allocation2 + $0x14]]
    %v129 = vstv %s128
    %v130 = vmul.f32 %v90, %v129
    %v131 = vadd.f32 %v127, %v130
    %s132 = sld [smem:[#allocation2 + $0x17]]
    %v133 = vstv %s132
    %v134 = vadd.f32 %v131, %v133
    %v135 = vmax.f32 %v134, 0.0
    %s136 = sld [smem:[#allocation2 + $0x18]]
    %v137 = vstv %s136
    %v138 = vmul.f32 %v105, %v137
    %s139 = sld [smem:[#allocation2 + $0x1b]]
    %v140 = vstv %s139
    %v141 = vmul.f32 %v120, %v140
    %v142 = vadd.f32 %v138, %v141
    %s143 = sld [smem:[#allocation2 + $0x1e]]
    %v144 = vstv %s143
    %v145 = vmul.f32 %v135, %v144
    %v146 = vadd.f32 %v142, %v145
    %s147 = sld [smem:[#allocation2 + $0x21]]
    %v148 = vstv %s147
    %v149 = vadd.f32 %v146, %v148
    %v150 = vmax.f32 %v149, 0.0
    %s151 = sld [smem:[#allocation2 + $0x19]]
    %v152 = vstv %s151
    %v153 = vmul.f32 %v105, %v152
    %s154 = sld [smem:[#allocation2 + $0x1c]]
    %v155 = vstv %s154
    %v156 = vmul.f32 %v120, %v155
    %v157 = vadd.f32 %v153, %v156
    %s158 = sld [smem:[#allocation2 + $0x1f]]
    %v159 = vstv %s158
    %v160 = vmul.f32 %v135, %v159
    %v161 = vadd.f32 %v157, %v160
    %s162 = sld [smem:[#allocation2 + $0x22]]
    %v163 = vstv %s162
    %v164 = vadd.f32 %v161, %v163
    %v165 = vmax.f32 %v164, 0.0
    %s166 = sld [smem:[#allocation2 + $0x1a]]
    %v167 = vstv %s166
    %v168 = vmul.f32 %v105, %v167
    %s169 = sld [smem:[#allocation2 + $0x1d]]
    %v170 = vstv %s169
    %v171 = vmul.f32 %v120, %v170
    %v172 = vadd.f32 %v168, %v171
    %s173 = sld [smem:[#allocation2 + $0x20]]
    %v174 = vstv %s173
    %v175 = vmul.f32 %v135, %v174
    %v176 = vadd.f32 %v172, %v175
    %s177 = sld [smem:[#allocation2 + $0x23]]
    %v178 = vstv %s177
    %v179 = vadd.f32 %v176, %v178
    %v180 = vmax.f32 %v179, 0.0
    %s181 = sld [smem:[#allocation2 + $0x24]]
    %v182 = vstv %s181
    %v183 = vmul.f32 %v150, %v182
    %s184 = sld [smem:[#allocation2 + $0x26]]
    %v185 = vstv %s184
    %v186 = vmul.f32 %v165, %v185
    %v187 = vadd.f32 %v183, %v186
    %s188 = sld [smem:[#allocation2 + $0x28]]
    %v189 = vstv %s188
    %v190 = vmul.f32 %v180, %v189
    %v191 = vadd.f32 %v187, %v190
    %s192 = sld [smem:[#allocation2 + $0x2a]]
    %v193 = vstv %s192
    %v194 = vadd.f32 %v191, %v193
    %195 = vst [vmem:[#allocation7] sm:$0xff] %v194
    %s196 = sld [smem:[#allocation2 + $0x25]]
    %v197 = vstv %s196
    %v198 = vmul.f32 %v150, %v197
    %s199 = sld [smem:[#allocation2 + $0x27]]
    %v200 = vstv %s199
    %v201 = vmul.f32 %v165, %v200
    %v202 = vadd.f32 %v198, %v201
    %s203 = sld [smem:[#allocation2 + $0x29]]
    %v204 = vstv %s203
    %v205 = vmul.f32 %v180, %v204
    %v206 = vadd.f32 %v202, %v205
    %s207 = sld [smem:[#allocation2 + $0x2b]]
    %v208 = vstv %s207
    %v209 = vadd.f32 %v206, %v208
    %s210 = scalar_lea.vmem [#allocation7], 8
    %211 = vst [vmem:[%s210] sm:$0xff] %v209
    // Predicated region
    $region18: #{tpu_custom_call.1} parent=1 // pred_check
      _
    $region19: #{tpu_custom_call.1} parent=1 // pred_check_branch
      %213 = sbr.rel (0) target = $region21
    $region20: #{tpu_custom_call.1} parent=1 // pred_region
      %s215 = ssub.s32 256, 256
      %216 = vsyncadd [#allocation4], %s215
      %s217 = sshll.u32 [#allocation7], 4
      %s218 = int_to_ptr.vmem [resolvable:$true] %s217
      %223 = dma.vmem_to_hbm [thread:$0]  %s218, 256, %s2, [#allocation4], 128, 128, 8
    $region21: #{tpu_custom_call.1} parent=1 // pred_fallthru
      _
    // Predicated region
    $region22: #{tpu_custom_call.1} parent=1 // pred_check
      _
    $region23: #{tpu_custom_call.1} parent=1 // pred_check_branch
      %225 = sbr.rel (0) target = $region25
    $region24: #{tpu_custom_call.1} parent=1 // pred_region
      %226 = dma.done [#allocation4], 256
    $region25: #{tpu_custom_call.1} parent=1 // pred_fallthru
      _
    %227 = vsyncpa [#allocation3], 1
    %228 = vsyncpa [#allocation4], 1
    %229 = vsyncpa [#allocation5], 1

</llo_original>
